<compile_context>
chip_gen: v7x
topology: tpu7x:2x2x1
jax: 0.10.0
libtpu: 0.0.40
codegen_flags: <defaults>
</compile_context>

<pallas_src>
import jax
import jax.numpy as jnp
from jax.experimental import pallas as pl
from jax.experimental.pallas import tpu as pltpu


def _round_up(x, m):
    return (x + m - 1) // m * m


# ----------------------------------------------------------------------------
# Pallas kernel: per-box CE + smooth-L1 + per-batch partial sums.
# Block layouts (per (b, t) grid cell):
#   label_ref : (1, 1, TILE_D) int32   labels, boxes lane-dense
#   locp_ref  : (1, 4, TILE_D) f32     predicted loc, coords on sublanes
#   loct_ref  : (1, 4, TILE_D) f32     encoded target loc
#   conf_ref  : (1, C, TILE_D) f32     class logits, classes on sublanes
#   ce_ref    : (1, 1, TILE_D) f32     per-box cross entropy (output)
#   stats_ref : (1, 8, 128)    f32     per-batch accumulator:
#                                      row 0 = smooth-L1 sum over positives
#                                      row 1 = number of positives
#                                      row 2 = CE sum over positives
# ----------------------------------------------------------------------------
def _multibox_loss_kernel(label_ref, locp_ref, loct_ref, conf_ref,
                          ce_ref, stats_ref):
    t = pl.program_id(1)

    labels = label_ref[0]                                  # (1, TILE_D) int32
    pos = labels > 0
    posf = pos.astype(jnp.float32)

    # ---- localization loss: smooth L1 summed over positive boxes ----
    diff = locp_ref[0] - loct_ref[0]                       # (4, TILE_D)
    ad = jnp.abs(diff)
    sl1 = jnp.where(ad < 1.0, 0.5 * diff * diff, ad - 0.5)
    ll_part = jnp.sum(sl1 * posf)                          # posf broadcasts over sublanes

    # ---- per-box cross entropy (classes on sublanes, boxes lane-dense) ----
    logits = conf_ref[0]                                   # (C, TILE_D)
    m = jnp.max(logits, axis=0, keepdims=True)             # (1, TILE_D)
    shifted = logits - m
    lse = jnp.log(jnp.sum(jnp.exp(shifted), axis=0, keepdims=True))   # (1, TILE_D)
    cls_iota = jax.lax.broadcasted_iota(jnp.int32, logits.shape, 0)
    true_shift = jnp.sum(jnp.where(cls_iota == labels, shifted, 0.0),
                         axis=0, keepdims=True)            # (1, TILE_D)
    ce = lse - true_shift                                  # (1, TILE_D)
    ce_ref[...] = ce[None]                                 # lane-dense output

    npos_part = jnp.sum(posf)
    posce_part = jnp.sum(jnp.where(pos, ce, 0.0))

    # ---- per-batch partial-sum accumulator across D tiles ----
    @pl.when(t == 0)
    def _():
        stats_ref[...] = jnp.zeros_like(stats_ref)

    row = jax.lax.broadcasted_iota(jnp.int32, stats_ref.shape, 1)
    upd = jnp.where(row == 0, ll_part,
          jnp.where(row == 1, npos_part,
          jnp.where(row == 2, posce_part, 0.0)))
    stats_ref[...] += upd


def _call_loss_kernel(labels, locp_T, loct_T, conf_T, tile_d):
    B, C, d_pad = conf_T.shape
    assert tile_d % 128 == 0 and d_pad % tile_d == 0
    n_tiles = d_pad // tile_d

    ce, stats = pl.pallas_call(
        _multibox_loss_kernel,
        out_shape=(jax.ShapeDtypeStruct((B, 1, d_pad), jnp.float32),
                   jax.ShapeDtypeStruct((B, 8, 128), jnp.float32)),
        grid=(B, n_tiles),
        in_specs=[
            pl.BlockSpec((1, 1, tile_d), lambda b, t: (b, 0, t)),
            pl.BlockSpec((1, 4, tile_d), lambda b, t: (b, 0, t)),
            pl.BlockSpec((1, 4, tile_d), lambda b, t: (b, 0, t)),
            pl.BlockSpec((1, C, tile_d), lambda b, t: (b, 0, t)),
        ],
        out_specs=(
            pl.BlockSpec((1, 1, tile_d), lambda b, t: (b, 0, t)),
            pl.BlockSpec((1, 8, 128), lambda b, t: (b, 0, 0)),
        ),
        compiler_params=pltpu.CompilerParams(
            dimension_semantics=("parallel", "arbitrary"),
            vmem_limit_bytes=32 * 1024 * 1024),
    )(labels, locp_T, loct_T, conf_T)
    return ce, stats


# ----------------------------------------------------------------------------
# Plain-JAX glue: SSD match() (jaccard matching + box encoding).
# TODO(synk): per-image variable-length target lists are modeled with a fixed
#             number of ground-truth boxes per image (no padding logic).
# ----------------------------------------------------------------------------
def _point_form(boxes):  # (D,4) (cx,cy,w,h) -> (x1,y1,x2,y2)
    return jnp.concatenate([boxes[:, :2] - boxes[:, 2:] / 2,
                            boxes[:, :2] + boxes[:, 2:] / 2], axis=1)


def _jaccard(box_a, box_b):  # (A,4),(B,4) corner form -> (A,B) IoU
    max_xy = jnp.minimum(box_a[:, None, 2:], box_b[None, :, 2:])
    min_xy = jnp.maximum(box_a[:, None, :2], box_b[None, :, :2])
    inter_wh = jnp.clip(max_xy - min_xy, 0.0)
    inter = inter_wh[..., 0] * inter_wh[..., 1]
    area_a = ((box_a[:, 2] - box_a[:, 0]) * (box_a[:, 3] - box_a[:, 1]))[:, None]
    area_b = ((box_b[:, 2] - box_b[:, 0]) * (box_b[:, 3] - box_b[:, 1]))[None, :]
    return inter / (area_a + area_b - inter)


def _match_one(truths, labels, dbox, threshold, variances):
    overlaps = _jaccard(truths, _point_form(dbox))       # (num_obj, D)
    best_prior_idx = jnp.argmax(overlaps, axis=1)        # (num_obj,)
    best_truth_overlap = jnp.max(overlaps, axis=0)       # (D,)
    best_truth_idx = jnp.argmax(overlaps, axis=0)        # (D,)
    best_truth_overlap = best_truth_overlap.at[best_prior_idx].set(2.0)
    best_truth_idx = best_truth_idx.at[best_prior_idx].set(
        jnp.arange(truths.shape[0], dtype=best_truth_idx.dtype))
    matches = truths[best_truth_idx]                     # (D, 4)
    conf = labels[best_truth_idx].astype(jnp.int32) + 1
    conf = jnp.where(best_truth_overlap < threshold, 0, conf)
    # encode
    g_cxcy = (matches[:, :2] + matches[:, 2:]) / 2.0 - dbox[:, :2]
    g_cxcy = g_cxcy / (variances[0] * dbox[:, 2:])
    g_wh = (matches[:, 2:] - matches[:, :2]) / dbox[:, 2:]
    g_wh = jnp.log(g_wh) / variances[1]
    loc = jnp.concatenate([g_cxcy, g_wh], axis=1)
    return loc, conf


def ssd_match_targets(dbox_list, targets, jaccard_thresh=0.5):
    """targets: (B, num_obj, 5) = (x1, y1, x2, y2, label)."""
    variances = (0.1, 0.2)
    truths = targets[..., :-1]
    labels = targets[..., -1]
    loc_t, conf_t = jax.vmap(
        lambda t, l: _match_one(t, l, dbox_list, jaccard_thresh, variances)
    )(truths, labels)
    return loc_t.astype(jnp.float32), conf_t.astype(jnp.int32)


def _choose_tile(D):
    d128 = _round_up(D, 128)
    return d128 if d128 <= 1024 else 512


# ----------------------------------------------------------------------------
# Forward pass (same semantics as the PyTorch MultiBoxLoss.forward)
# ----------------------------------------------------------------------------
def multibox_loss(loc_data, conf_data, dbox_list, targets,
                  jaccard_thresh=0.5, neg_pos=3, tile_d=None):
    loc_t, conf_t = ssd_match_targets(dbox_list, targets, jaccard_thresh)

    B, D, C = conf_data.shape
    if tile_d is None:
        tile_d = _choose_tile(D)
    d_pad = _round_up(D, tile_d)
    pad = d_pad - D

    # Lane-dense, D-padded layouts (padded boxes -> label 0 = background).
    labels = jnp.pad(conf_t, ((0, 0), (0, pad)))[:, None, :]                  # (B,1,Dp) i32
    locp_T = jnp.pad(jnp.transpose(loc_data.astype(jnp.float32), (0, 2, 1)),
                     ((0, 0), (0, 0), (0, pad)))                              # (B,4,Dp)
    loct_T = jnp.pad(jnp.transpose(loc_t, (0, 2, 1)),
                     ((0, 0), (0, 0), (0, pad)))                              # (B,4,Dp)
    conf_T = jnp.pad(jnp.transpose(conf_data.astype(jnp.float32), (0, 2, 1)),
                     ((0, 0), (0, 0), (0, pad)))                              # (B,C,Dp)

    ce_pad, stats = _call_loss_kernel(labels, locp_T, loct_T, conf_T, tile_d)

    loss_l = jnp.sum(stats[:, 0, 0])                     # smooth-L1 over positives
    num_pos_b = stats[:, 1, 0]                           # (B,) float counts
    pos_ce = jnp.sum(stats[:, 2, 0])                     # CE sum over positives

    # ---- hard-negative mining: top-num_neg sum via sort+cumsum (exact) ----
    ce = ce_pad[:, 0, :D]                                # (B, D), padding sliced off
    pos = conf_t > 0
    lc = jnp.where(pos, 0.0, ce)
    sorted_desc = -jnp.sort(-lc, axis=1)
    csum = jnp.cumsum(sorted_desc, axis=1)
    num_pos_i = jnp.round(num_pos_b).astype(jnp.int32)
    num_neg = jnp.minimum(num_pos_i * neg_pos, D)        # torch: clamp(max=num_dbox)
    idx = jnp.clip(num_neg - 1, 0, D - 1)
    top_sum = jnp.take_along_axis(csum, idx[:, None], axis=1)[:, 0]
    neg_sum = jnp.where(num_neg > 0, top_sum, 0.0)
    loss_c = pos_ce + jnp.sum(neg_sum)

    n = jnp.sum(num_pos_b)
    # TODO(synk): n == 0 yields inf/nan, matching the PyTorch reference hazard.
    return loss_l / n, loss_c / n


# ----------------------------------------------------------------------------
# Pure-JAX reference (torch semantics, used for a correctness check).
# ----------------------------------------------------------------------------
def reference_loss(loc_data, conf_data, loc_t, conf_t, negpos_ratio=3):
    pos = conf_t > 0
    diff = loc_data - loc_t
    ad = jnp.abs(diff)
    sl1 = jnp.where(ad < 1.0, 0.5 * diff * diff, ad - 0.5)
    loss_l = jnp.sum(sl1 * pos[..., None])
    lse = jax.scipy.special.logsumexp(conf_data, axis=-1)
    true_logit = jnp.take_along_axis(conf_data, conf_t[..., None], axis=-1)[..., 0]
    ce = lse - true_logit
    lc = jnp.where(pos, 0.0, ce)
    loss_idx = jnp.argsort(-lc, axis=1)
    idx_rank = jnp.argsort(loss_idx, axis=1)
    num_pos = jnp.sum(pos, axis=1)
    num_neg = jnp.minimum(num_pos * negpos_ratio, lc.shape[1])
    neg = idx_rank < num_neg[:, None]
    keep = pos | neg
    loss_c = jnp.sum(jnp.where(keep, ce, 0.0))
    n = jnp.sum(num_pos).astype(jnp.float32)
    return loss_l / n, loss_c / n


if __name__ == "__main__":
    B, D, C, NOBJ = 2, 300, 8, 3
    key = jax.random.PRNGKey(0)
    k1, k2, k3, k4, k5, k6, k7 = jax.random.split(key, 7)

    # default boxes in (cx, cy, w, h)
    cxcy = jax.random.uniform(k1, (D, 2), minval=0.1, maxval=0.9)
    wh = jax.random.uniform(k2, (D, 2), minval=0.1, maxval=0.4)
    dbox_list = jnp.concatenate([cxcy, wh], axis=1).astype(jnp.float32)

    loc_data = (0.1 * jax.random.normal(k3, (B, D, 4))).astype(jnp.float32)
    conf_data = jax.random.normal(k4, (B, D, C)).astype(jnp.float32)

    # ground-truth targets: (B, NOBJ, 5) = (x1, y1, x2, y2, class_label)
    tl = jax.random.uniform(k5, (B, NOBJ, 2), minval=0.05, maxval=0.55)
    sz = jax.random.uniform(k6, (B, NOBJ, 2), minval=0.2, maxval=0.4)
    br = jnp.clip(tl + sz, 0.0, 1.0)
    gt_labels = jax.random.randint(k7, (B, NOBJ), 0, C - 1).astype(jnp.float32)
    targets = jnp.concatenate([tl, br, gt_labels[..., None]], axis=-1)

    # tile_d=128 -> D padded to 384, grid=(B, 3): exercises padding + multi-tile
    loss_l, loss_c = multibox_loss(loc_data, conf_data, dbox_list, targets, tile_d=128)
    jax.block_until_ready((loss_l, loss_c))

    # correctness check against pure-JAX reference (torch semantics)
    loc_t, conf_t = ssd_match_targets(dbox_list, targets)
    ref_l, ref_c = reference_loss(loc_data, conf_data, loc_t, conf_t)
    assert jnp.allclose(loss_l, ref_l, rtol=1e-4, atol=1e-4), (loss_l, ref_l)
    assert jnp.allclose(loss_c, ref_c, rtol=1e-4, atol=1e-4), (loss_c, ref_c)

    print("KERNEL_OK")
</pallas_src>

<mosaic_0001>
module attributes {stable_mosaic.version = 11 : i64} {
  func.func @_multibox_loss_kernel(%arg0: i32, %arg1: i32, %arg2: memref<1x1x128xi32, #tpu.memory_space<vmem>>, %arg3: memref<1x4x128xf32, #tpu.memory_space<vmem>>, %arg4: memref<1x4x128xf32, #tpu.memory_space<vmem>>, %arg5: memref<1x8x128xf32, #tpu.memory_space<vmem>>, %arg6: memref<1x1x128xf32, #tpu.memory_space<vmem>>, %arg7: memref<1x8x128xf32, #tpu.memory_space<vmem>>) attributes {dimension_semantics = [#tpu.dimension_semantics<parallel>, #tpu.dimension_semantics<arbitrary>], iteration_bounds = array<i64: 2, 3>, scalar_prefetch = 0 : i64, scratch_operands = 0 : i64, tpu.core_type = #tpu.core_type<tc>, window_params = [{transform_indices = @transform_0, window_bounds = array<i64: 1, 1, 128>}, {transform_indices = @transform_1, window_bounds = array<i64: 1, 4, 128>}, {transform_indices = @transform_2, window_bounds = array<i64: 1, 4, 128>}, {transform_indices = @transform_3, window_bounds = array<i64: 1, 8, 128>}, {transform_indices = @transform_4, window_bounds = array<i64: 1, 1, 128>}, {transform_indices = @transform_5, window_bounds = array<i64: 1, 8, 128>}]} {
    %c0 = arith.constant 0 : index
    %c0_0 = arith.constant 0 : index
    %c0_1 = arith.constant 0 : index
    %0 = vector.load %arg2[%c0, %c0_0, %c0_1] : memref<1x1x128xi32, #tpu.memory_space<vmem>>, vector<1x1x128xi32>
    %1 = vector.shape_cast %0 : vector<1x1x128xi32> to vector<1x128xi32>
    %c0_i32 = arith.constant 0 : i32
    %2 = vector.broadcast %c0_i32 : i32 to vector<1x128xi32>
    %3 = arith.cmpi sgt, %1, %2 : vector<1x128xi32>
    %4 = arith.extui %3 : vector<1x128xi1> to vector<1x128xi32>
    %5 = arith.sitofp %4 : vector<1x128xi32> to vector<1x128xf32>
    %c0_2 = arith.constant 0 : index
    %c0_3 = arith.constant 0 : index
    %c0_4 = arith.constant 0 : index
    %6 = vector.load %arg3[%c0_2, %c0_3, %c0_4] : memref<1x4x128xf32, #tpu.memory_space<vmem>>, vector<1x4x128xf32>
    %7 = vector.shape_cast %6 : vector<1x4x128xf32> to vector<4x128xf32>
    %c0_5 = arith.constant 0 : index
    %c0_6 = arith.constant 0 : index
    %c0_7 = arith.constant 0 : index
    %8 = vector.load %arg4[%c0_5, %c0_6, %c0_7] : memref<1x4x128xf32, #tpu.memory_space<vmem>>, vector<1x4x128xf32>
    %9 = vector.shape_cast %8 : vector<1x4x128xf32> to vector<4x128xf32>
    %10 = arith.subf %7, %9 : vector<4x128xf32>
    %11 = math.absf %10 : vector<4x128xf32>
    %cst = arith.constant 1.000000e+00 : f32
    %12 = vector.broadcast %cst : f32 to vector<4x128xf32>
    %13 = arith.cmpf olt, %11, %12 : vector<4x128xf32>
    %cst_8 = arith.constant 5.000000e-01 : f32
    %14 = vector.broadcast %cst_8 : f32 to vector<4x128xf32>
    %15 = arith.mulf %14, %10 : vector<4x128xf32>
    %16 = arith.mulf %15, %10 : vector<4x128xf32>
    %cst_9 = arith.constant 5.000000e-01 : f32
    %17 = vector.broadcast %cst_9 : f32 to vector<4x128xf32>
    %18 = arith.subf %11, %17 : vector<4x128xf32>
    %19 = arith.select %13, %16, %18 : vector<4x128xi1>, vector<4x128xf32>
    %20 = vector.broadcast %5 : vector<1x128xf32> to vector<4x128xf32>
    %21 = arith.mulf %19, %20 : vector<4x128xf32>
    %22 = vector.shape_cast %21 : vector<4x128xf32> to vector<1x4x128xf32>
    %cst_10 = arith.constant dense<0.000000e+00> : vector<1xf32>
    %23 = vector.multi_reduction <add>, %22, %cst_10 [1, 2] : vector<1x4x128xf32> to vector<1xf32>
    %24 = vector.shape_cast %23 : vector<1xf32> to vector<1x1x1xf32>
    %25 = vector.extract %24[0, 0, 0] : f32 from vector<1x1x1xf32>
    %c0_11 = arith.constant 0 : index
    %c0_12 = arith.constant 0 : index
    %c0_13 = arith.constant 0 : index
    %26 = vector.load %arg5[%c0_11, %c0_12, %c0_13] : memref<1x8x128xf32, #tpu.memory_space<vmem>>, vector<1x8x128xf32>
    %27 = vector.shape_cast %26 : vector<1x8x128xf32> to vector<8x128xf32>
    %cst_14 = arith.constant dense<0xFF800000> : vector<128xf32>
    %28 = vector.multi_reduction <maximumf>, %27, %cst_14 [0] : vector<8x128xf32> to vector<128xf32>
    %29 = vector.shape_cast %28 : vector<128xf32> to vector<1x128xf32>
    %30 = vector.broadcast %29 : vector<1x128xf32> to vector<8x128xf32>
    %31 = arith.subf %27, %30 : vector<8x128xf32>
    %32 = math.exp %31 : vector<8x128xf32>
    %cst_15 = arith.constant dense<0.000000e+00> : vector<128xf32>
    %33 = vector.multi_reduction <add>, %32, %cst_15 [0] : vector<8x128xf32> to vector<128xf32>
    %34 = vector.shape_cast %33 : vector<128xf32> to vector<1x128xf32>
    %35 = math.log %34 : vector<1x128xf32>
    %36 = tpu.iota {dimensions = array<i32: 0>} : vector<8x128xi32>
    %37 = vector.broadcast %1 : vector<1x128xi32> to vector<8x128xi32>
    %38 = arith.cmpi eq, %36, %37 : vector<8x128xi32>
    %cst_16 = arith.constant 0.000000e+00 : f32
    %39 = vector.broadcast %cst_16 : f32 to vector<8x128xf32>
    %40 = arith.select %38, %31, %39 : vector<8x128xi1>, vector<8x128xf32>
    %cst_17 = arith.constant dense<0.000000e+00> : vector<128xf32>
    %41 = vector.multi_reduction <add>, %40, %cst_17 [0] : vector<8x128xf32> to vector<128xf32>
    %42 = vector.shape_cast %41 : vector<128xf32> to vector<1x128xf32>
    %43 = arith.subf %35, %42 : vector<1x128xf32>
    %44 = vector.shape_cast %43 : vector<1x128xf32> to vector<1x1x128xf32>
    %c0_18 = arith.constant 0 : index
    %c0_19 = arith.constant 0 : index
    %c0_20 = arith.constant 0 : index
    %45 = vector.load %arg6[%c0_18, %c0_19, %c0_20] : memref<1x1x128xf32, #tpu.memory_space<vmem>>, vector<1x1x128xf32>
    tpu.vector_store %arg6[%c0_18, %c0_19, %c0_20], %44 {strides = array<i32>} : memref<1x1x128xf32, #tpu.memory_space<vmem>>, vector<1x1x128xf32>,
    %46 = vector.shape_cast %5 : vector<1x128xf32> to vector<1x1x128xf32>
    %cst_21 = arith.constant dense<0.000000e+00> : vector<1xf32>
    %47 = vector.multi_reduction <add>, %46, %cst_21 [1, 2] : vector<1x1x128xf32> to vector<1xf32>
    %48 = vector.shape_cast %47 : vector<1xf32> to vector<1x1x1xf32>
    %49 = vector.extract %48[0, 0, 0] : f32 from vector<1x1x1xf32>
    %cst_22 = arith.constant 0.000000e+00 : f32
    %50 = vector.broadcast %cst_22 : f32 to vector<1x128xf32>
    %51 = arith.select %3, %43, %50 : vector<1x128xi1>, vector<1x128xf32>
    %52 = vector.shape_cast %51 : vector<1x128xf32> to vector<1x1x128xf32>
    %cst_23 = arith.constant dense<0.000000e+00> : vector<1xf32>
    %53 = vector.multi_reduction <add>, %52, %cst_23 [1, 2] : vector<1x1x128xf32> to vector<1xf32>
    %54 = vector.shape_cast %53 : vector<1xf32> to vector<1x1x1xf32>
    %55 = vector.extract %54[0, 0, 0] : f32 from vector<1x1x1xf32>
    %c0_i32_24 = arith.constant 0 : i32
    %56 = arith.cmpi eq, %arg1, %c0_i32_24 : i32
    %57 = arith.extui %56 : i1 to i32
    %c0_i32_25 = arith.constant 0 : i32
    %58 = arith.cmpi ne, %57, %c0_i32_25 : i32
    scf.if %58 {
      %cst_34 = arith.constant 0.000000e+00 : f32
      %76 = vector.broadcast %cst_34 : f32 to vector<1x8x128xf32>
      %c0_35 = arith.constant 0 : index
      %c0_36 = arith.constant 0 : index
      %c0_37 = arith.constant 0 : index
      %77 = vector.load %arg7[%c0_35, %c0_36, %c0_37] : memref<1x8x128xf32, #tpu.memory_space<vmem>>, vector<1x8x128xf32>
      tpu.vector_store %arg7[%c0_35, %c0_36, %c0_37], %76 {strides = array<i32>} : memref<1x8x128xf32, #tpu.memory_space<vmem>>, vector<1x8x128xf32>,
    } else {
    }
    %59 = tpu.iota {dimensions = array<i32: 1>} : vector<1x8x128xi32>
    %c0_i32_26 = arith.constant 0 : i32
    %60 = vector.broadcast %c0_i32_26 : i32 to vector<1x8x128xi32>
    %61 = arith.cmpi eq, %59, %60 : vector<1x8x128xi32>
    %c1_i32 = arith.constant 1 : i32
    %62 = vector.broadcast %c1_i32 : i32 to vector<1x8x128xi32>
    %63 = arith.cmpi eq, %59, %62 : vector<1x8x128xi32>
    %c2_i32 = arith.constant 2 : i32
    %64 = vector.broadcast %c2_i32 : i32 to vector<1x8x128xi32>
    %65 = arith.cmpi eq, %59, %64 : vector<1x8x128xi32>
    %cst_27 = arith.constant 0.000000e+00 : f32
    %66 = vector.broadcast %55 : f32 to vector<1x8x128xf32>
    %67 = vector.broadcast %cst_27 : f32 to vector<1x8x128xf32>
    %68 = arith.select %65, %66, %67 : vector<1x8x128xi1>, vector<1x8x128xf32>
    %69 = vector.broadcast %49 : f32 to vector<1x8x128xf32>
    %70 = arith.select %63, %69, %68 : vector<1x8x128xi1>, vector<1x8x128xf32>
    %71 = vector.broadcast %25 : f32 to vector<1x8x128xf32>
    %72 = arith.select %61, %71, %70 : vector<1x8x128xi1>, vector<1x8x128xf32>
    %c0_28 = arith.constant 0 : index
    %c0_29 = arith.constant 0 : index
    %c0_30 = arith.constant 0 : index
    %73 = vector.load %arg7[%c0_28, %c0_29, %c0_30] : memref<1x8x128xf32, #tpu.memory_space<vmem>>, vector<1x8x128xf32>
    %74 = arith.addf %73, %72 : vector<1x8x128xf32>
    %c0_31 = arith.constant 0 : index
    %c0_32 = arith.constant 0 : index
    %c0_33 = arith.constant 0 : index
    %75 = vector.load %arg7[%c0_31, %c0_32, %c0_33] : memref<1x8x128xf32, #tpu.memory_space<vmem>>, vector<1x8x128xf32>
    tpu.vector_store %arg7[%c0_31, %c0_32, %c0_33], %74 {strides = array<i32>} : memref<1x8x128xf32, #tpu.memory_space<vmem>>, vector<1x8x128xf32>,
    return
  }
  func.func @transform_0(%arg0: i32, %arg1: i32) -> (i32, i32, i32) {
    %c0_i32 = arith.constant 0 : i32
    %c0_i32_0 = arith.constant 0 : i32
    return %arg0, %c0_i32, %arg1 : i32, i32, i32
  }
  func.func @transform_1(%arg0: i32, %arg1: i32) -> (i32, i32, i32) {
    %c0_i32 = arith.constant 0 : i32
    %c0_i32_0 = arith.constant 0 : i32
    return %arg0, %c0_i32, %arg1 : i32, i32, i32
  }
  func.func @transform_2(%arg0: i32, %arg1: i32) -> (i32, i32, i32) {
    %c0_i32 = arith.constant 0 : i32
    %c0_i32_0 = arith.constant 0 : i32
    return %arg0, %c0_i32, %arg1 : i32, i32, i32
  }
  func.func @transform_3(%arg0: i32, %arg1: i32) -> (i32, i32, i32) {
    %c0_i32 = arith.constant 0 : i32
    %c0_i32_0 = arith.constant 0 : i32
    return %arg0, %c0_i32, %arg1 : i32, i32, i32
  }
  func.func @transform_4(%arg0: i32, %arg1: i32) -> (i32, i32, i32) {
    %c0_i32 = arith.constant 0 : i32
    %c0_i32_0 = arith.constant 0 : i32
    return %arg0, %c0_i32, %arg1 : i32, i32, i32
  }
  func.func @transform_5(%arg0: i32, %arg1: i32) -> (i32, i32, i32) {
    %c0_i32 = arith.constant 0 : i32
    %c0_i32_0 = arith.constant 0 : i32
    %c0_i32_1 = arith.constant 0 : i32
    return %arg0, %c0_i32, %c0_i32_0 : i32, i32, i32
  }
}

</mosaic_0001>

<llo_original>
// kernel: tpu_custom_call.1
$region0: #{tpu_custom_call.1}
  #allocation0 [shape = 'u32[]', space=smem, size = 0x4, offset = 0x4, fixed_abs, tag = 'smem constant byte address 0x4 - core index']
  #allocation1 [shape = 'u32[144,128]{1,0:T(1,128)}', space=vmem, size = 0x12000, scoped, tag = 'internal scratch']
  %s0 = inlined_call_operand.hbm [shape: s32[2,1,384], index: 0, kind: input, shape index: {}]
  %s1 = inlined_call_operand.hbm [shape: f32[2,4,384], index: 1, kind: input, shape index: {}]
  %s2 = inlined_call_operand.hbm [shape: f32[2,4,384], index: 2, kind: input, shape index: {}]
  %s3 = inlined_call_operand.hbm [shape: f32[2,8,384], index: 3, kind: input, shape index: {}]
  %s4 = inlined_call_operand.hbm [shape: f32[2,1,384], index: 4, kind: output, shape index: {0}]
  %s5 = inlined_call_operand.hbm [shape: f32[2,8,128], index: 5, kind: output, shape index: {1}]
  %6 = xla_tuple %s4, %s5
  %s7 = sld [smem:[#allocation0]]
  $region77: #{tpu_custom_call.1} parent=0
    _
  %s9 = ssub.s32 1, %s7
  %s10 = scalar_select 0, %s9, %s7
  $region1: #{tpu_custom_call.1} parent=0
    #allocation2 [shape = 'u8[1024]{0}', space=vmem, size = 0x400, scoped, tag = 'input window, operand 0']
    #allocation3 [shape = 's32[2]{0}', space=sflag, size = 0x8, scoped, tag = 'scoped memory for tpu_custom_call.1']
    #allocation4 [shape = 's32[2]{0}', space=sflag, size = 0x8, scoped, tag = 'scoped memory for tpu_custom_call.1']
    #allocation5 [shape = 'u8[4096]{0}', space=vmem, size = 0x1000, scoped, tag = 'input window, operand 1']
    #allocation6 [shape = 's32[2]{0}', space=sflag, size = 0x8, scoped, tag = 'scoped memory for tpu_custom_call.1']
    #allocation7 [shape = 'u8[4096]{0}', space=vmem, size = 0x1000, scoped, tag = 'input window, operand 2']
    #allocation8 [shape = 'u8[8192]{0}', space=vmem, size = 0x2000, scoped, tag = 'input window, operand 3']
    #allocation9 [shape = 's32[2]{0}', space=sflag, size = 0x8, scoped, tag = 'scoped memory for tpu_custom_call.1']
    #allocation10 [shape = 'u8[1024]{0}', space=vmem, size = 0x400, scoped, tag = 'output window, operand 0']
    #allocation11 [shape = 'u8[8192]{0}', space=vmem, size = 0x2000, scoped, tag = 'output window, operand 1']
    #allocation12 [shape = 's32[2]{0}', space=sflag, size = 0x8, scoped, tag = 'scoped memory for tpu_custom_call.1']
    %11 = vsyncpa [#allocation3], 0
    %s12 = scalar_lea.sflag [#allocation3], 1
    %13 = vsyncpa %s12, 0
    %14 = vsyncpa [#allocation6], 0
    %s15 = scalar_lea.sflag [#allocation6], 1
    %16 = vsyncpa %s15, 0
    %17 = vsyncpa [#allocation9], 0
    %s18 = scalar_lea.sflag [#allocation9], 1
    %19 = vsyncpa %s18, 0
    %20 = vsyncpa [#allocation4], 0
    %s21 = scalar_lea.sflag [#allocation4], 1
    %22 = vsyncpa %s21, 0
    %23 = vsyncpa [#allocation12], 0
    %s24 = scalar_lea.sflag [#allocation12], 1
    %25 = vsyncpa %s24, 0
    loop: start=0, step=1, limit=8
    $region2: #{tpu_custom_call.1} parent=1 // loop_pre_header
      _
    $region3: #{tpu_custom_call.1} parent=1 // loop_header
      %s27 = sphi 0, %s31
      %p28 = scmp.ge.s32.totalorder %s27, 8
      %s34 = sphi 0, %s46
      %s35 = sphi 0, %s42
      %s36 = sphi 0, %s34
      %s37 = sphi 0, %s35
      %s38 = sphi 0, %s36
      %s39 = sphi 0, %s37
      %s51 = sphi 0, %s53
      %s54 = sphi 0, %s51
      %s55 = sphi 0, %s54
      %s71 = sphi 0, %s55
      %s79 = sphi 0, %s81
      %s82 = sphi 0, %s79
      %s83 = sphi 0, %s82
      %s99 = sphi 0, %s83
      %s107 = sphi 0, %s109
      %s110 = sphi 0, %s107
      %s111 = sphi 0, %s110
      %s127 = sphi 0, %s111
      %s135 = sphi 0, %s137
      %s138 = sphi 0, %s135
      %s139 = sphi 0, %s138
      %s155 = sphi 0, %s139
      %s163 = sphi 0, %s165
      %s166 = sphi 0, %s163
      %s167 = sphi 0, %s166
      %s183 = sphi 0, %s167
      %s189 = sphi 0, %s191
      %s192 = sphi 0, %s189
      %s193 = sphi 0, %s192
      %s209 = sphi 0, %s193
    $region4: #{tpu_custom_call.1} parent=1 // loop_header_branch
      %30 = sbr.rel (%p28) target = $region8
    $region5: #{tpu_custom_call.1} parent=1 // loop_body
      %s32 = ssub.s32 %s27, 1
      %s33 = ssub.s32 %s27, 2
      %s40 = sadd.s32 1, %s35
      %p41 = scmp.ge.s32.totalorder %s40, 3
      %s42 = scalar_select %p41, 0, %s40
      %s43 = sadd.s32 1, %s34
      %s44 = scalar_select %p41, %s43, %s34
      %p45 = scmp.ge.s32.totalorder %s44, 2
      %s46 = scalar_select %p45, 0, %s44
      %s47 = ssub.s32 %s34, %s46
      %s48 = ssub.s32 %s35, %s42
      %s49 = sor.u32 %s47, %s48
      %p50 = scmp.eq.s32.totalorder %s49, 0
      %s52 = sadd.s32 %s51, 1
      %s53 = scalar_select %p50, %s51, %s52
      %p56 = pneg %p50
      %p57 = scmp.eq.s32.totalorder %s27, 5
      %p58 = por %p56, %p57
      %p59 = scmp.ne.s32.totalorder %s51, %s54
      %p60 = scmp.eq.s32.totalorder %s27, 0
      %p61 = por %p59, %p60
      %p62 = scmp.ne.s32.totalorder %s51, %s54
      %p63 = scmp.eq.s32.totalorder %s32, 5
      %p64 = por %p62, %p63
      %p65 = scmp.ne.s32.totalorder %s54, %s55
      %p66 = scmp.eq.s32.totalorder %s32, 0
      %p67 = por %p65, %p66
      %p68 = scmp.ne.s32.totalorder %s54, %s55
      %p69 = scmp.eq.s32.totalorder %s33, 5
      %p70 = por %p68, %p69
      %p72 = scmp.ne.s32.totalorder %s55, %s71
      %p73 = scmp.eq.s32.totalorder %s33, 0
      %p74 = por %p72, %p73
      %s75 = ssub.s32 %s34, %s46
      %s76 = ssub.s32 %s35, %s42
      %s77 = sor.u32 %s75, %s76
      %p78 = scmp.eq.s32.totalorder %s77, 0
      %s80 = sadd.s32 %s79, 1
      %s81 = scalar_select %p78, %s79, %s80
      %p84 = pneg %p78
      %p85 = scmp.eq.s32.totalorder %s27, 5
      %p86 = por %p84, %p85
      %p87 = scmp.ne.s32.totalorder %s79, %s82
      %p88 = scmp.eq.s32.totalorder %s27, 0
      %p89 = por %p87, %p88
      %p90 = scmp.ne.s32.totalorder %s79, %s82
      %p91 = scmp.eq.s32.totalorder %s32, 5
      %p92 = por %p90, %p91
      %p93 = scmp.ne.s32.totalorder %s82, %s83
      %p94 = scmp.eq.s32.totalorder %s32, 0
      %p95 = por %p93, %p94
      %p96 = scmp.ne.s32.totalorder %s82, %s83
      %p97 = scmp.eq.s32.totalorder %s33, 5
      %p98 = por %p96, %p97
      %p100 = scmp.ne.s32.totalorder %s83, %s99
      %p101 = scmp.eq.s32.totalorder %s33, 0
      %p102 = por %p100, %p101
      %s103 = ssub.s32 %s34, %s46
      %s104 = ssub.s32 %s35, %s42
      %s105 = sor.u32 %s103, %s104
      %p106 = scmp.eq.s32.totalorder %s105, 0
      %s108 = sadd.s32 %s107, 1
      %s109 = scalar_select %p106, %s107, %s108
      %p112 = pneg %p106
      %p113 = scmp.eq.s32.totalorder %s27, 5
      %p114 = por %p112, %p113
      %p115 = scmp.ne.s32.totalorder %s107, %s110
      %p116 = scmp.eq.s32.totalorder %s27, 0
      %p117 = por %p115, %p116
      %p118 = scmp.ne.s32.totalorder %s107, %s110
      %p119 = scmp.eq.s32.totalorder %s32, 5
      %p120 = por %p118, %p119
      %p121 = scmp.ne.s32.totalorder %s110, %s111
      %p122 = scmp.eq.s32.totalorder %s32, 0
      %p123 = por %p121, %p122
      %p124 = scmp.ne.s32.totalorder %s110, %s111
      %p125 = scmp.eq.s32.totalorder %s33, 5
      %p126 = por %p124, %p125
      %p128 = scmp.ne.s32.totalorder %s111, %s127
      %p129 = scmp.eq.s32.totalorder %s33, 0
      %p130 = por %p128, %p129
      %s131 = ssub.s32 %s34, %s46
      %s132 = ssub.s32 %s35, %s42
      %s133 = sor.u32 %s131, %s132
      %p134 = scmp.eq.s32.totalorder %s133, 0
      %s136 = sadd.s32 %s135, 1
      %s137 = scalar_select %p134, %s135, %s136
      %p140 = pneg %p134
      %p141 = scmp.eq.s32.totalorder %s27, 5
      %p142 = por %p140, %p141
      %p143 = scmp.ne.s32.totalorder %s135, %s138
      %p144 = scmp.eq.s32.totalorder %s27, 0
      %p145 = por %p143, %p144
      %p146 = scmp.ne.s32.totalorder %s135, %s138
      %p147 = scmp.eq.s32.totalorder %s32, 5
      %p148 = por %p146, %p147
      %p149 = scmp.ne.s32.totalorder %s138, %s139
      %p150 = scmp.eq.s32.totalorder %s32, 0
      %p151 = por %p149, %p150
      %p152 = scmp.ne.s32.totalorder %s138, %s139
      %p153 = scmp.eq.s32.totalorder %s33, 5
      %p154 = por %p152, %p153
      %p156 = scmp.ne.s32.totalorder %s139, %s155
      %p157 = scmp.eq.s32.totalorder %s33, 0
      %p158 = por %p156, %p157
      %s159 = ssub.s32 %s34, %s46
      %s160 = ssub.s32 %s35, %s42
      %s161 = sor.u32 %s159, %s160
      %p162 = scmp.eq.s32.totalorder %s161, 0
      %s164 = sadd.s32 %s163, 1
      %s165 = scalar_select %p162, %s163, %s164
      %p168 = pneg %p162
      %p169 = scmp.eq.s32.totalorder %s27, 5
      %p170 = por %p168, %p169
      %p171 = scmp.ne.s32.totalorder %s163, %s166
      %p172 = scmp.eq.s32.totalorder %s27, 0
      %p173 = por %p171, %p172
      %p174 = scmp.ne.s32.totalorder %s163, %s166
      %p175 = scmp.eq.s32.totalorder %s32, 5
      %p176 = por %p174, %p175
      %p177 = scmp.ne.s32.totalorder %s166, %s167
      %p178 = scmp.eq.s32.totalorder %s32, 0
      %p179 = por %p177, %p178
      %p180 = scmp.ne.s32.totalorder %s166, %s167
      %p181 = scmp.eq.s32.totalorder %s33, 5
      %p182 = por %p180, %p181
      %p184 = scmp.ne.s32.totalorder %s167, %s183
      %p185 = scmp.eq.s32.totalorder %s33, 0
      %p186 = por %p184, %p185
      %s187 = ssub.s32 %s34, %s46
      %p188 = scmp.eq.s32.totalorder %s187, 0
      %s190 = sadd.s32 %s189, 1
      %s191 = scalar_select %p188, %s189, %s190
      %p194 = pneg %p188
      %p195 = scmp.eq.s32.totalorder %s27, 5
      %p196 = por %p194, %p195
      %p197 = scmp.ne.s32.totalorder %s189, %s192
      %p198 = scmp.eq.s32.totalorder %s27, 0
      %p199 = por %p197, %p198
      %p200 = scmp.ne.s32.totalorder %s189, %s192
      %p201 = scmp.eq.s32.totalorder %s32, 5
      %p202 = por %p200, %p201
      %p203 = scmp.ne.s32.totalorder %s192, %s193
      %p204 = scmp.eq.s32.totalorder %s32, 0
      %p205 = por %p203, %p204
      %p206 = scmp.ne.s32.totalorder %s192, %s193
      %p207 = scmp.eq.s32.totalorder %s33, 5
      %p208 = por %p206, %p207
      %p210 = scmp.ne.s32.totalorder %s193, %s209
      %p211 = scmp.eq.s32.totalorder %s33, 0
      %p212 = por %p210, %p211
      %p213 = scmp.le.s32.totalorder 1, %s27
      %p214 = scmp.lt.s32.totalorder %s27, 7
      %p215 = pnand %p213, %p214
      %p216 = pneg %p215
      // Predicated region
      $region9: #{tpu_custom_call.1} parent=5 // pred_check
        _
      $region10: #{tpu_custom_call.1} parent=5 // pred_check_branch
        %218 = sbr.rel (%p215) target = $region12
      $region11: #{tpu_custom_call.1} parent=5 // pred_region
        %s219 = ssub.s32 %s27, 1
      $region12: #{tpu_custom_call.1} parent=5 // pred_fallthru
        _
      %p220 = scmp.lt.s32.totalorder %s27, 6
      // Predicated region
      $region13: #{tpu_custom_call.1} parent=5 // pred_check
        %p221 = pneg %p220
      $region14: #{tpu_custom_call.1} parent=5 // pred_check_branch
        %223 = sbr.rel (%p221) target = $region16
      $region15: #{tpu_custom_call.1} parent=5 // pred_region
        // Predicated region
        $region17: #{tpu_custom_call.1} parent=15 // pred_check
          %p224 = pneg %p61
        $region18: #{tpu_custom_call.1} parent=15 // pred_check_branch
          %226 = sbr.rel (%p224) target = $region20
        $region19: #{tpu_custom_call.1} parent=15 // pred_region
          %s227 = sand.u32 %s51, 1
          %s228 = scalar_lea.sflag [#allocation3], %s227
          %s229 = sand.u32 %s51, 1
          %s230 = scalar_lea.vmem [#allocation2], %s229
          %s232 = ssub.s32 16, 16
          %233 = vsyncadd %s228, %s232
          %s234 = smul.addr %s34, 3
          %s235 = sadd.s32 %s35, %s234
          %s236 = smul.addr %s235, 16
          %s237 = scalar_lea.hbm %s0, %s236
          %s239 = sshll.u32 %s230, 4
          %s240 = int_to_ptr.vmem [resolvable:$true] %s239
          %242 = dma.hbm_to_vmem [thread:$0]  %s237, 16, %s240, %s228
        $region20: #{tpu_custom_call.1} parent=15 // pred_fallthru
          _
        // Predicated region
        $region21: #{tpu_custom_call.1} parent=15 // pred_check
          %p243 = pneg %p89
        $region22: #{tpu_custom_call.1} parent=15 // pred_check_branch
          %245 = sbr.rel (%p243) target = $region24
        $region23: #{tpu_custom_call.1} parent=15 // pred_region
          %s246 = sand.u32 %s27, 1
          %s247 = scalar_lea.sflag [#allocation6], %s246
          %s248 = sand.u32 %s79, 1
          %s249 = smul.addr %s248, 4
          %s250 = scalar_lea.vmem [#allocation5], %s249
          %s252 = ssub.s32 64, 64
          %253 = vsyncadd %s247, %s252
          %s254 = smul.addr %s34, 3
          %s255 = sadd.s32 %s35, %s254
          %s256 = smul.addr %s255, 64
          %s257 = scalar_lea.hbm %s1, %s256
          %s259 = sshll.u32 %s250, 4
          %s260 = int_to_ptr.vmem [resolvable:$true] %s259
          %262 = dma.hbm_to_vmem [thread:$0]  %s257, 64, %s260, %s247
        $region24: #{tpu_custom_call.1} parent=15 // pred_fallthru
          _
        // Predicated region
        $region25: #{tpu_custom_call.1} parent=15 // pred_check
          %p263 = pneg %p117
        $region26: #{tpu_custom_call.1} parent=15 // pred_check_branch
          %265 = sbr.rel (%p263) target = $region28
        $region27: #{tpu_custom_call.1} parent=15 // pred_region
          %s266 = sand.u32 %s27, 1
          %s267 = scalar_lea.sflag [#allocation6], %s266
          %s268 = sand.u32 %s107, 1
          %s269 = smul.addr %s268, 4
          %s270 = scalar_lea.vmem [#allocation7], %s269
          %s272 = ssub.s32 64, 64
          %273 = vsyncadd %s267, %s272
          %s274 = smul.addr %s34, 3
          %s275 = sadd.s32 %s35, %s274
          %s276 = smul.addr %s275, 64
          %s277 = scalar_lea.hbm %s2, %s276
          %s279 = sshll.u32 %s270, 4
          %s280 = int_to_ptr.vmem [resolvable:$true] %s279
          %282 = dma.hbm_to_vmem [thread:$0]  %s277, 64, %s280, %s267
        $region28: #{tpu_custom_call.1} parent=15 // pred_fallthru
          _
        // Predicated region
        $region29: #{tpu_custom_call.1} parent=15 // pred_check
          %p283 = pneg %p145
        $region30: #{tpu_custom_call.1} parent=15 // pred_check_branch
          %285 = sbr.rel (%p283) target = $region32
        $region31: #{tpu_custom_call.1} parent=15 // pred_region
          %s286 = sand.u32 %s135, 1
          %s287 = scalar_lea.sflag [#allocation9], %s286
          %s288 = sand.u32 %s135, 1
          %s289 = smul.addr %s288, 8
          %s290 = scalar_lea.vmem [#allocation8], %s289
          %s292 = ssub.s32 128, 128
          %293 = vsyncadd %s287, %s292
          %s294 = smul.addr %s34, 3
          %s295 = sadd.s32 %s35, %s294
          %s296 = smul.addr %s295, 128
          %s297 = scalar_lea.hbm %s3, %s296
          %s299 = sshll.u32 %s290, 4
          %s300 = int_to_ptr.vmem [resolvable:$true] %s299
          %302 = dma.hbm_to_vmem [thread:$0]  %s297, 128, %s300, %s287
        $region32: #{tpu_custom_call.1} parent=15 // pred_fallthru
          _
      $region16: #{tpu_custom_call.1} parent=5 // pred_fallthru
        _
      %p303 = scmp.le.s32.totalorder 1, %s27
      %p304 = scmp.lt.s32.totalorder %s27, 7
      %p305 = pnand %p303, %p304
      %p306 = pneg %p305
      // Predicated region
      $region33: #{tpu_custom_call.1} parent=5 // pred_check
        _
      $region34: #{tpu_custom_call.1} parent=5 // pred_check_branch
        %308 = sbr.rel (%p305) target = $region36
      $region35: #{tpu_custom_call.1} parent=5 // pred_region
        %s309 = ssub.s32 %s27, 1
        %s310 = sand.u32 %s54, 1
        %s311 = scalar_lea.sflag [#allocation3], %s310
        %s312 = sand.u32 %s54, 1
        %s313 = scalar_lea.vmem [#allocation2], %s312
        // Predicated region
        $region37: #{tpu_custom_call.1} parent=35 // pred_check
          %p314 = pneg %p67
        $region38: #{tpu_custom_call.1} parent=35 // pred_check_branch
          %316 = sbr.rel (%p314) target = $region40
        $region39: #{tpu_custom_call.1} parent=35 // pred_region
          %317 = dma.done %s311, 16
        $region40: #{tpu_custom_call.1} parent=35 // pred_fallthru
          _
        %s318 = sand.u32 %s32, 1
        %s319 = scalar_lea.sflag [#allocation6], %s318
        %s320 = sand.u32 %s82, 1
        %s321 = smul.addr %s320, 4
        %s322 = scalar_lea.vmem [#allocation5], %s321
        // Predicated region
        $region41: #{tpu_custom_call.1} parent=35 // pred_check
          %p323 = pneg %p95
        $region42: #{tpu_custom_call.1} parent=35 // pred_check_branch
          %325 = sbr.rel (%p323) target = $region44
        $region43: #{tpu_custom_call.1} parent=35 // pred_region
          %326 = dma.done %s319, 64
        $region44: #{tpu_custom_call.1} parent=35 // pred_fallthru
          _
        %s327 = sand.u32 %s32, 1
        %s328 = scalar_lea.sflag [#allocation6], %s327
        %s329 = sand.u32 %s110, 1
        %s330 = smul.addr %s329, 4
        %s331 = scalar_lea.vmem [#allocation7], %s330
        // Predicated region
        $region45: #{tpu_custom_call.1} parent=35 // pred_check
          %p332 = pneg %p123
        $region46: #{tpu_custom_call.1} parent=35 // pred_check_branch
          %334 = sbr.rel (%p332) target = $region48
        $region47: #{tpu_custom_call.1} parent=35 // pred_region
          %335 = dma.done %s328, 64
        $region48: #{tpu_custom_call.1} parent=35 // pred_fallthru
          _
        %s336 = sand.u32 %s138, 1
        %s337 = scalar_lea.sflag [#allocation9], %s336
        %s338 = sand.u32 %s138, 1
        %s339 = smul.addr %s338, 8
        %s340 = scalar_lea.vmem [#allocation8], %s339
        // Predicated region
        $region49: #{tpu_custom_call.1} parent=35 // pred_check
          %p341 = pneg %p151
        $region50: #{tpu_custom_call.1} parent=35 // pred_check_branch
          %343 = sbr.rel (%p341) target = $region52
        $region51: #{tpu_custom_call.1} parent=35 // pred_region
          %344 = dma.done %s337, 128
        $region52: #{tpu_custom_call.1} parent=35 // pred_fallthru
          _
        %s345 = sand.u32 %s54, 1
        %s346 = scalar_lea.sflag [#allocation3], %s345
        %s347 = sand.u32 %s54, 1
        %s348 = scalar_lea.vmem [#allocation2], %s347
        %p349 = pneg %p67
        %p350 = pneg %p64
        %s351 = sand.u32 %s32, 1
        %s352 = scalar_lea.sflag [#allocation6], %s351
        %s353 = sand.u32 %s82, 1
        %s354 = smul.addr %s353, 4
        %s355 = scalar_lea.vmem [#allocation5], %s354
        %p356 = pneg %p95
        %p357 = pneg %p92
        %s358 = sand.u32 %s32, 1
        %s359 = scalar_lea.sflag [#allocation6], %s358
        %s360 = sand.u32 %s110, 1
        %s361 = smul.addr %s360, 4
        %s362 = scalar_lea.vmem [#allocation7], %s361
        %p363 = pneg %p123
        %p364 = pneg %p120
        %s365 = sand.u32 %s138, 1
        %s366 = scalar_lea.sflag [#allocation9], %s365
        %s367 = sand.u32 %s138, 1
        %s368 = smul.addr %s367, 8
        %s369 = scalar_lea.vmem [#allocation8], %s368
        %p370 = pneg %p151
        %p371 = pneg %p148
        %p372 = pneg %p179
        %p373 = pneg %p176
        %s374 = sand.u32 %s166, 1
        %s375 = scalar_lea.sflag [#allocation4], %s374
        %s376 = sand.u32 %s166, 1
        %s377 = scalar_lea.vmem [#allocation10], %s376
        %p378 = pneg %p205
        %p379 = pneg %p202
        %s380 = sand.u32 %s192, 1
        %s381 = scalar_lea.sflag [#allocation12], %s380
        %s382 = sand.u32 %s192, 1
        %s383 = smul.addr %s382, 8
        %s384 = scalar_lea.vmem [#allocation11], %s383
        %v385 = vld [vmem:[%s313] sm:$0x1]
        %vm386 = vcmp.gt.s32.totalorder %v385, 0
        %v387 = vsel %vm386, 1, 0
        %v388 = vcvt.s32.f32 %v387
        %v389 = vld [vmem:[%s322] sm:$0xf]
        %v390 = vld [vmem:[%s331] sm:$0xf]
        %v391 = vsub.f32 %v389, %v390
        %v392 = vand.u32 2147483647, %v391
        %vm393 = vcmp.lt.f32.partialorder %v392, 1.0
        %v394 = vmul.f32 %v391, 0.5
        %v395 = vmul.f32 %v394, %v391
        %v396 = vsub.f32 %v392, 0.5
        %v397 = vsel %vm393, %v395, %v396
        %v399 = vlaneseq
        %v400 = vshrl.u32 %v399, 7
        %v401 = vsub.s32 0, %v400
        %v402 = vrot.slane %v388, %v401
        %v404 = vmul.f32 %v397, %v402
        %vm405 = vcmask 1043456
        %v406 = vsel %vm405, %v404, 0.0
        %407 = vadd.xlane.f32.xlu0 %v406
        %v408 = vpop.xlane.xlu0 %407
        %v409 = vrot.slane %v408, 4
        %v410 = vadd.f32 %v408, %v409
        %v411 = vrot.slane %v410, 2
        %v412 = vadd.f32 %v410, %v411
        %v413 = vrot.slane %v412, 1
        %v414 = vadd.f32 %v412, %v413
        %s415 = vtos %v414
        %v416 = vld [vmem:[%s340] sm:$0xff]
        %v417 = vrot.slane %v416, 4
        %v418 = vmax.f32 %v416, %v417
        %v419 = vrot.slane %v418, 2
        %v420 = vmax.f32 %v418, %v419
        %v421 = vrot.slane %v420, 1
        %v422 = vmax.f32 %v420, %v421
        %v423 = vsub.f32 %v416, %v422
        %v424 = vmul.f32 %v423, 1.442695
        %v425 = vpow.pop %v424
        %v426 = vrot.slane %v425, 4
        %v427 = vadd.f32 %v425, %v426
        %v428 = vrot.slane %v427, 2
        %v429 = vadd.f32 %v427, %v428
        %v430 = vrot.slane %v429, 1
        %v431 = vadd.f32 %v429, %v430
        %v432 = vlog2.pop %v431
        %v433 = vmul.f32 %v432, 0.6931472
        %v434 = vlaneseq
        %v435 = vshrl.u32 %v434, 7
        %v436 = vlaneseq
        %v437 = vshrl.u32 %v436, 7
        %v438 = vsub.s32 0, %v437
        %v439 = vrot.slane %v385, %v438
        %vm440 = vcmp.eq.s32.totalorder %v435, %v439
        %v441 = vsel %vm440, %v423, 0.0
        %v442 = vrot.slane %v441, 4
        %v443 = vadd.f32 %v441, %v442
        %v444 = vrot.slane %v443, 2
        %v445 = vadd.f32 %v443, %v444
        %v446 = vrot.slane %v445, 1
        %v447 = vadd.f32 %v445, %v446
        %v448 = vsub.f32 %v433, %v447
        %449 = vst [vmem:[%s377] sm:$0x1] %v448
        %vm450 = vcmask 1040384
        %v451 = vsel %vm450, %v388, 0.0
        %452 = vadd.xlane.f32.xlu0 %v451
        %v453 = vpop.xlane.xlu0 %452
        %v454 = vrot.slane %v453, 4
        %v455 = vadd.f32 %v453, %v454
        %v456 = vrot.slane %v455, 2
        %v457 = vadd.f32 %v455, %v456
        %v458 = vrot.slane %v457, 1
        %v459 = vadd.f32 %v457, %v458
        %s460 = vtos %v459
        %v461 = vsel %vm386, %v448, 0.0
        %v462 = vsel %vm450, %v461, 0.0
        %463 = vadd.xlane.f32.xlu0 %v462
        %v464 = vpop.xlane.xlu0 %463
        %v465 = vrot.slane %v464, 4
        %v466 = vadd.f32 %v464, %v465
        %v467 = vrot.slane %v466, 2
        %v468 = vadd.f32 %v466, %v467
        %v469 = vrot.slane %v468, 1
        %v470 = vadd.f32 %v468, %v469
        %s471 = vtos %v470
        %p472 = scmp.eq.s32.totalorder %s37, 0
        // Predicated region
        $region53: #{tpu_custom_call.1} parent=35 // pred_check
          %p473 = pneg %p472
        $region54: #{tpu_custom_call.1} parent=35 // pred_check_branch
          %475 = sbr.rel (%p473) target = $region56
        $region55: #{tpu_custom_call.1} parent=35 // pred_region
          %476 = vst [vmem:[%s384] sm:$0xff] 0.0
        $region56: #{tpu_custom_call.1} parent=35 // pred_fallthru
          _
        %vm477 = vcmp.eq.s32.totalorder %v435, 0
        %vm478 = vcmp.eq.s32.totalorder %v435, 1
        %vm479 = vcmp.eq.s32.totalorder %v435, 2
        %v480 = vstv %s471
        %v481 = vsel %vm479, %v480, 0.0
        %v482 = vstv %s460
        %v483 = vsel %vm478, %v482, %v481
        %v484 = vstv %s415
        %v485 = vsel %vm477, %v484, %v483
        %v486 = vld [vmem:[%s384] sm:$0xff]
        %v487 = vadd.f32 %v486, %v485
        %488 = vst [vmem:[%s384] sm:$0xff] %v487
        %s489 = sand.u32 %s166, 1
        %s490 = scalar_lea.sflag [#allocation4], %s489
        %s491 = sand.u32 %s166, 1
        %s492 = scalar_lea.vmem [#allocation10], %s491
        %s493 = sand.u32 %s192, 1
        %s494 = scalar_lea.sflag [#allocation12], %s493
        %s495 = sand.u32 %s192, 1
        %s496 = smul.addr %s495, 8
        %s497 = scalar_lea.vmem [#allocation11], %s496
        // Predicated region
        $region57: #{tpu_custom_call.1} parent=35 // pred_check
          %p498 = pneg %p176
        $region58: #{tpu_custom_call.1} parent=35 // pred_check_branch
          %500 = sbr.rel (%p498) target = $region60
        $region59: #{tpu_custom_call.1} parent=35 // pred_region
          %s502 = ssub.s32 16, 16
          %503 = vsyncadd %s490, %s502
          %s504 = smul.addr %s36, 3
          %s505 = sadd.s32 %s37, %s504
          %s506 = smul.addr %s505, 16
          %s507 = scalar_lea.hbm %s4, %s506
          %s509 = sshll.u32 %s492, 4
          %s510 = int_to_ptr.vmem [resolvable:$true] %s509
          %512 = dma.vmem_to_hbm [thread:$0]  %s510, 16, %s507, %s490
        $region60: #{tpu_custom_call.1} parent=35 // pred_fallthru
          _
        // Predicated region
        $region61: #{tpu_custom_call.1} parent=35 // pred_check
          %p513 = pneg %p202
        $region62: #{tpu_custom_call.1} parent=35 // pred_check_branch
          %515 = sbr.rel (%p513) target = $region64
        $region63: #{tpu_custom_call.1} parent=35 // pred_region
          %s517 = ssub.s32 128, 128
          %518 = vsyncadd %s494, %s517
          %s519 = smul.addr %s36, 128
          %s520 = scalar_lea.hbm %s5, %s519
          %s522 = sshll.u32 %s497, 4
          %s523 = int_to_ptr.vmem [resolvable:$true] %s522
          %525 = dma.vmem_to_hbm [thread:$0]  %s523, 128, %s520, %s494
        $region64: #{tpu_custom_call.1} parent=35 // pred_fallthru
          _
      $region36: #{tpu_custom_call.1} parent=5 // pred_fallthru
        _
      %p526 = scmp.le.s32.totalorder 2, %s27
      // Predicated region
      $region65: #{tpu_custom_call.1} parent=5 // pred_check
        %p527 = pneg %p526
      $region66: #{tpu_custom_call.1} parent=5 // pred_check_branch
        %529 = sbr.rel (%p527) target = $region68
      $region67: #{tpu_custom_call.1} parent=5 // pred_region
        %s530 = ssub.s32 %s27, 2
        // Predicated region
        $region69: #{tpu_custom_call.1} parent=67 // pred_check
          %p531 = pneg %p182
        $region70: #{tpu_custom_call.1} parent=67 // pred_check_branch
          %533 = sbr.rel (%p531) target = $region72
        $region71: #{tpu_custom_call.1} parent=67 // pred_region
          %s534 = sand.u32 %s167, 1
          %s535 = scalar_lea.sflag [#allocation4], %s534
          %s536 = sand.u32 %s167, 1
          %s537 = scalar_lea.vmem [#allocation10], %s536
          %538 = dma.done %s535, 16
        $region72: #{tpu_custom_call.1} parent=67 // pred_fallthru
          _
        // Predicated region
        $region73: #{tpu_custom_call.1} parent=67 // pred_check
          %p539 = pneg %p208
        $region74: #{tpu_custom_call.1} parent=67 // pred_check_branch
          %541 = sbr.rel (%p539) target = $region76
        $region75: #{tpu_custom_call.1} parent=67 // pred_region
          %s542 = sand.u32 %s193, 1
          %s543 = scalar_lea.sflag [#allocation12], %s542
          %s544 = sand.u32 %s193, 1
          %s545 = smul.addr %s544, 8
          %s546 = scalar_lea.vmem [#allocation11], %s545
          %547 = dma.done %s543, 128
        $region76: #{tpu_custom_call.1} parent=67 // pred_fallthru
          _
      $region68: #{tpu_custom_call.1} parent=5 // pred_fallthru
        _
    $region6: #{tpu_custom_call.1} parent=1 // loop_footer
      %s31 = sadd.s32 1, %s27
    $region7: #{tpu_custom_call.1} parent=1 // loop_footer_branch
      %26 = sbr.rel target = $region3
    $region8: #{tpu_custom_call.1} parent=1 // loop_exit
      _
    %548 = vsyncpa [#allocation3], 1
    %s549 = scalar_lea.sflag [#allocation3], 1
    %550 = vsyncpa %s549, 1
    %551 = vsyncpa [#allocation6], 1
    %s552 = scalar_lea.sflag [#allocation6], 1
    %553 = vsyncpa %s552, 1
    %554 = vsyncpa [#allocation9], 1
    %s555 = scalar_lea.sflag [#allocation9], 1
    %556 = vsyncpa %s555, 1
    %557 = vsyncpa [#allocation4], 1
    %s558 = scalar_lea.sflag [#allocation4], 1
    %559 = vsyncpa %s558, 1
    %560 = vsyncpa [#allocation12], 1
    %s561 = scalar_lea.sflag [#allocation12], 1
    %562 = vsyncpa %s561, 1

</llo_original>
